<compile_context>
chip_gen: v7x
topology: tpu7x:2x2x1
jax: 0.10.0
libtpu: 0.0.40
codegen_flags: <defaults>
</compile_context>

<pallas_src>
import functools

import jax
import jax.numpy as jnp
from jax.experimental import pallas as pl
from jax.experimental.pallas import tpu as pltpu


def _round_up(n, m):
    return ((n + m - 1) // m) * m


def mole_kernel(scal_ref, x_ref, t_ref, w1_ref, b1_ref, w2_ref, b2_ref, out_ref):
    # h1T = (x @ w1^T)^T = w1 @ x^T, computed as A @ B^T (both contract last dim).
    h1 = jax.lax.dot_general(
        w1_ref[...], x_ref[...],
        dimension_numbers=(((1,), (1,)), ((), ())),
        preferred_element_type=jnp.float32) + b1_ref[...]            # (S, TILE_N)

    h2 = jnp.tanh(
        jnp.dot(w2_ref[...], h1, preferred_element_type=jnp.float32)
        + b2_ref[...])                                               # (3, TILE_N)

    w3_0 = scal_ref[0]
    w3_1 = scal_ref[1]
    w3_2 = scal_ref[2]
    b3 = scal_ref[3]
    t_a = scal_ref[4]
    t_b = scal_ref[5]

    # Linear(3, 1) as three VPU FMAs instead of a degenerate K=3, N=1 MXU matmul.
    y1 = (w3_0 * h2[0:1, :] + w3_1 * h2[1:2, :] + w3_2 * h2[2:3, :] + b3)  # (1, TILE_N)

    # Hoisted scalar epilogue: tanh(y1)*4 + 24 on the (1, TILE_N) row only.
    y1p = jnp.tanh(y1) * 4.0 + 24.0                                  # (1, TILE_N)

    # T is used in its native (M, N) layout -> lane-dense, no transpose anywhere.
    y2 = jnp.tanh(t_a * t_ref[...] + t_b) * 2.0                      # (M, TILE_N)

    out_ref[...] = y1p + y2                                          # (M, TILE_N), lane-dense store


def init_mole_params(key, source_nums):
    """Deterministic synthetic parameters, stored PyTorch-style (out, in)."""
    k1, k2, k3, k4, k5, k6 = jax.random.split(key, 6)
    s = source_nums
    return {
        "w1": jax.random.normal(k1, (s, s), jnp.float32) * 0.1,   # Linear(S, S).weight
        "b1": jax.random.normal(k2, (s,), jnp.float32) * 0.1,
        "w2": jax.random.normal(k3, (3, s), jnp.float32) * 0.1,   # Linear(S, 3).weight
        "b2": jax.random.normal(k4, (3,), jnp.float32) * 0.1,
        "w3": jax.random.normal(k5, (1, 3), jnp.float32) * 0.1,   # Linear(3, 1).weight
        "b3": jax.random.normal(k6, (1,), jnp.float32) * 0.1,
        "T_a": jnp.array(0.01, jnp.float32),
        "T_b": jnp.array(-6.0, jnp.float32),
    }


def mole_forward(x, T, params):
    """x: (N, S); T: (M, N) as in the PyTorch forward. Returns (N, M)."""
    x = x.astype(jnp.float32)
    T = T.astype(jnp.float32)          # used directly in (M, N) layout
    N, S = x.shape
    M, NT = T.shape
    assert NT == N

    # Tile the batch axis N (the lane axis of the transposed compute layout).
    if N <= 512:
        tile_n = _round_up(N, 8)       # single tile; block dims == full dims
    else:
        tile_n = 512                   # multiple of 128 -> legal lane tiling
    n_pad = _round_up(N, tile_n)

    if n_pad != N:
        x = jnp.pad(x, ((0, n_pad - N), (0, 0)))
        T = jnp.pad(T, ((0, 0), (0, n_pad - N)))

    w1 = params["w1"]                                   # (S, S)   (out, in)
    b1c = params["b1"].reshape(S, 1)                    # (S, 1)
    w2 = params["w2"]                                   # (3, S)
    b2c = params["b2"].reshape(3, 1)                    # (3, 1)
    scal = jnp.concatenate([
        params["w3"].reshape(-1),                       # w3_0, w3_1, w3_2
        params["b3"].reshape(-1),                       # b3
        jnp.reshape(params["T_a"], (1,)),               # T_a
        jnp.reshape(params["T_b"], (1,)),               # T_b
    ]).astype(jnp.float32)                              # (6,)

    grid = (n_pad // tile_n,)
    vmem_full = functools.partial(pl.BlockSpec)  # readability only

    out_t = pl.pallas_call(
        mole_kernel,
        out_shape=jax.ShapeDtypeStruct((M, n_pad), jnp.float32),
        grid=grid,
        in_specs=[
            pl.BlockSpec(memory_space=pltpu.MemorySpace.SMEM),        # scalars
            pl.BlockSpec((tile_n, S), lambda i: (i, 0)),              # x tile
            pl.BlockSpec((M, tile_n), lambda i: (0, i)),              # T tile (lane-dense)
            vmem_full((S, S), lambda i: (0, 0)),                      # w1 (resident)
            vmem_full((S, 1), lambda i: (0, 0)),                      # b1 (resident)
            vmem_full((3, S), lambda i: (0, 0)),                      # w2 (resident)
            vmem_full((3, 1), lambda i: (0, 0)),                      # b2 (resident)
        ],
        out_specs=pl.BlockSpec((M, tile_n), lambda i: (0, i)),        # lane-dense out
        compiler_params=pltpu.CompilerParams(
            dimension_semantics=("parallel",)),                       # megacore on v7x
    )(scal, x, T, w1, b1c, w2, b2c)

    # Back to the PyTorch (N, M) layout with a single transpose outside the kernel.
    return out_t[:, :N].T


def mole_reference(x, T, params):
    """Pure-JAX reference of the PyTorch forward for validation."""
    x = x.astype(jnp.float32)
    h1 = x @ params["w1"].T + params["b1"]
    h2 = jnp.tanh(h1 @ params["w2"].T + params["b2"])
    y1 = h2 @ params["w3"].T + params["b3"]
    y1 = jnp.tanh(y1) * 4.0
    y2 = jnp.tanh(params["T_a"] * T.astype(jnp.float32).T + params["T_b"]) * 2.0
    return 24.0 + y1 + y2


if __name__ == "__main__":
    key = jax.random.PRNGKey(0)
    kx, kT, kp, kx2, kT2 = jax.random.split(key, 5)

    # Primary small shapes: batch N=8, source_nums S=32, relation_nums M=4.
    N, S, M = 8, 32, 4
    x = jax.random.normal(kx, (N, S), jnp.float32)
    T = jax.random.uniform(kT, (M, N), jnp.float32, minval=200.0, maxval=900.0)
    params = init_mole_params(kp, S)

    out = jax.block_until_ready(mole_forward(x, T, params))
    ref = mole_reference(x, T, params)
    assert out.shape == (N, M)
    assert jnp.allclose(out, ref, atol=1e-3, rtol=1e-4), "mismatch vs reference (small)"

    # Secondary check exercising the multi-tile grid + N-padding path.
    N2, M2 = 1000, 6
    x2 = jax.random.normal(kx2, (N2, S), jnp.float32)
    T2 = jax.random.uniform(kT2, (M2, N2), jnp.float32, minval=200.0, maxval=900.0)
    out2 = jax.block_until_ready(mole_forward(x2, T2, params))
    ref2 = mole_reference(x2, T2, params)
    assert out2.shape == (N2, M2)
    assert jnp.allclose(out2, ref2, atol=1e-3, rtol=1e-4), "mismatch vs reference (tiled)"

    print("KERNEL_OK")
</pallas_src>

<mosaic_0001>
module attributes {stable_mosaic.version = 11 : i64} {
  func.func @mole_kernel(%arg0: i32, %arg1: memref<6xf32, #tpu.memory_space<smem>>, %arg2: memref<8x32xf32, #tpu.memory_space<vmem>>, %arg3: memref<4x8xf32, #tpu.memory_space<vmem>>, %arg4: memref<32x32xf32, #tpu.memory_space<vmem>>, %arg5: memref<32x1xf32, #tpu.memory_space<vmem>>, %arg6: memref<3x32xf32, #tpu.memory_space<vmem>>, %arg7: memref<3x1xf32, #tpu.memory_space<vmem>>, %arg8: memref<4x8xf32, #tpu.memory_space<vmem>>) attributes {dimension_semantics = [#tpu.dimension_semantics<parallel>], iteration_bounds = array<i64: 1>, scalar_prefetch = 0 : i64, scratch_operands = 0 : i64, tpu.core_type = #tpu.core_type<tc>, window_params = [{transform_indices = @transform_0, window_bounds = array<i64: 6>}, {transform_indices = @transform_1, window_bounds = array<i64: 8, 32>}, {transform_indices = @transform_2, window_bounds = array<i64: 4, 8>}, {pipeline_mode = #tpu.pipeline_mode<synchronous>, transform_indices = @transform_3, window_bounds = array<i64: 32, 32>}, {pipeline_mode = #tpu.pipeline_mode<synchronous>, transform_indices = @transform_4, window_bounds = array<i64: 32, 1>}, {pipeline_mode = #tpu.pipeline_mode<synchronous>, transform_indices = @transform_5, window_bounds = array<i64: 3, 32>}, {pipeline_mode = #tpu.pipeline_mode<synchronous>, transform_indices = @transform_6, window_bounds = array<i64: 3, 1>}, {transform_indices = @transform_7, window_bounds = array<i64: 4, 8>}]} {
    %c0 = arith.constant 0 : index
    %c0_0 = arith.constant 0 : index
    %0 = vector.load %arg4[%c0, %c0_0] : memref<32x32xf32, #tpu.memory_space<vmem>>, vector<32x32xf32>
    %c0_1 = arith.constant 0 : index
    %c0_2 = arith.constant 0 : index
    %1 = vector.load %arg2[%c0_1, %c0_2] : memref<8x32xf32, #tpu.memory_space<vmem>>, vector<8x32xf32>
    %cst = arith.constant dense<0.000000e+00> : vector<32x8xf32>
    %2 = tpu.matmul %0, %1, %cst {dimension_numbers = #tpu.dot_dimension_numbers<[1], [1], [0], [0], [0, 0, 1, 0], [], []>} : vector<32x32xf32>, vector<8x32xf32>, vector<32x8xf32> -> vector<32x8xf32>
    %c0_3 = arith.constant 0 : index
    %c0_4 = arith.constant 0 : index
    %3 = vector.load %arg5[%c0_3, %c0_4] : memref<32x1xf32, #tpu.memory_space<vmem>>, vector<32x1xf32>
    %4 = vector.broadcast %3 : vector<32x1xf32> to vector<32x8xf32>
    %5 = arith.addf %2, %4 : vector<32x8xf32>
    %c0_5 = arith.constant 0 : index
    %c0_6 = arith.constant 0 : index
    %6 = vector.load %arg6[%c0_5, %c0_6] : memref<3x32xf32, #tpu.memory_space<vmem>>, vector<3x32xf32>
    %cst_7 = arith.constant dense<0.000000e+00> : vector<3x8xf32>
    %7 = tpu.matmul %6, %5, %cst_7 {dimension_numbers = #tpu.dot_dimension_numbers<[1], [0], [0], [1], [0, 0, 1, 1], [], []>} : vector<3x32xf32>, vector<32x8xf32>, vector<3x8xf32> -> vector<3x8xf32>
    %c0_8 = arith.constant 0 : index
    %c0_9 = arith.constant 0 : index
    %8 = vector.load %arg7[%c0_8, %c0_9] : memref<3x1xf32, #tpu.memory_space<vmem>>, vector<3x1xf32>
    %9 = vector.broadcast %8 : vector<3x1xf32> to vector<3x8xf32>
    %10 = arith.addf %7, %9 : vector<3x8xf32>
    %11 = math.tanh %10 : vector<3x8xf32>
    %c0_10 = arith.constant 0 : index
    %12 = memref.load %arg1[%c0_10] : memref<6xf32, #tpu.memory_space<smem>>
    %c1 = arith.constant 1 : index
    %13 = memref.load %arg1[%c1] : memref<6xf32, #tpu.memory_space<smem>>
    %c2 = arith.constant 2 : index
    %14 = memref.load %arg1[%c2] : memref<6xf32, #tpu.memory_space<smem>>
    %c3 = arith.constant 3 : index
    %15 = memref.load %arg1[%c3] : memref<6xf32, #tpu.memory_space<smem>>
    %c4 = arith.constant 4 : index
    %16 = memref.load %arg1[%c4] : memref<6xf32, #tpu.memory_space<smem>>
    %c5 = arith.constant 5 : index
    %17 = memref.load %arg1[%c5] : memref<6xf32, #tpu.memory_space<smem>>
    %18 = vector.extract_strided_slice %11 {offsets = [0, 0], sizes = [1, 8], strides = [1, 1]} : vector<3x8xf32> to vector<1x8xf32>
    %19 = vector.broadcast %12 : f32 to vector<1x8xf32>
    %20 = arith.mulf %19, %18 : vector<1x8xf32>
    %21 = vector.extract_strided_slice %11 {offsets = [1, 0], sizes = [1, 8], strides = [1, 1]} : vector<3x8xf32> to vector<1x8xf32>
    %22 = vector.broadcast %13 : f32 to vector<1x8xf32>
    %23 = arith.mulf %22, %21 : vector<1x8xf32>
    %24 = arith.addf %20, %23 : vector<1x8xf32>
    %25 = vector.extract_strided_slice %11 {offsets = [2, 0], sizes = [1, 8], strides = [1, 1]} : vector<3x8xf32> to vector<1x8xf32>
    %26 = vector.broadcast %14 : f32 to vector<1x8xf32>
    %27 = arith.mulf %26, %25 : vector<1x8xf32>
    %28 = arith.addf %24, %27 : vector<1x8xf32>
    %29 = vector.broadcast %15 : f32 to vector<1x8xf32>
    %30 = arith.addf %28, %29 : vector<1x8xf32>
    %31 = math.tanh %30 : vector<1x8xf32>
    %cst_11 = arith.constant 4.000000e+00 : f32
    %32 = vector.broadcast %cst_11 : f32 to vector<1x8xf32>
    %33 = arith.mulf %31, %32 : vector<1x8xf32>
    %cst_12 = arith.constant 2.400000e+01 : f32
    %34 = vector.broadcast %cst_12 : f32 to vector<1x8xf32>
    %35 = arith.addf %33, %34 : vector<1x8xf32>
    %c0_13 = arith.constant 0 : index
    %c0_14 = arith.constant 0 : index
    %36 = vector.load %arg3[%c0_13, %c0_14] : memref<4x8xf32, #tpu.memory_space<vmem>>, vector<4x8xf32>
    %37 = vector.broadcast %16 : f32 to vector<4x8xf32>
    %38 = arith.mulf %37, %36 : vector<4x8xf32>
    %39 = vector.broadcast %17 : f32 to vector<4x8xf32>
    %40 = arith.addf %38, %39 : vector<4x8xf32>
    %41 = math.tanh %40 : vector<4x8xf32>
    %cst_15 = arith.constant 2.000000e+00 : f32
    %42 = vector.broadcast %cst_15 : f32 to vector<4x8xf32>
    %43 = arith.mulf %41, %42 : vector<4x8xf32>
    %44 = vector.broadcast %35 : vector<1x8xf32> to vector<4x8xf32>
    %45 = arith.addf %44, %43 : vector<4x8xf32>
    %c0_16 = arith.constant 0 : index
    %c0_17 = arith.constant 0 : index
    %46 = vector.load %arg8[%c0_16, %c0_17] : memref<4x8xf32, #tpu.memory_space<vmem>>, vector<4x8xf32>
    tpu.vector_store %arg8[%c0_16, %c0_17], %45 {strides = array<i32>} : memref<4x8xf32, #tpu.memory_space<vmem>>, vector<4x8xf32>,
    return
  }
  func.func @transform_0(%arg0: i32) -> i32 {
    %c0_i32 = arith.constant 0 : i32
    %c0_i32_0 = arith.constant 0 : i32
    return %c0_i32 : i32
  }
  func.func @transform_1(%arg0: i32) -> (i32, i32) {
    %c0_i32 = arith.constant 0 : i32
    %c0_i32_0 = arith.constant 0 : i32
    return %arg0, %c0_i32 : i32, i32
  }
  func.func @transform_2(%arg0: i32) -> (i32, i32) {
    %c0_i32 = arith.constant 0 : i32
    %c0_i32_0 = arith.constant 0 : i32
    return %c0_i32, %arg0 : i32, i32
  }
  func.func @transform_3(%arg0: i32) -> (i32, i32) {
    %c0_i32 = arith.constant 0 : i32
    %c0_i32_0 = arith.constant 0 : i32
    %c0_i32_1 = arith.constant 0 : i32
    return %c0_i32, %c0_i32_0 : i32, i32
  }
  func.func @transform_4(%arg0: i32) -> (i32, i32) {
    %c0_i32 = arith.constant 0 : i32
    %c0_i32_0 = arith.constant 0 : i32
    %c0_i32_1 = arith.constant 0 : i32
    return %c0_i32, %c0_i32_0 : i32, i32
  }
  func.func @transform_5(%arg0: i32) -> (i32, i32) {
    %c0_i32 = arith.constant 0 : i32
    %c0_i32_0 = arith.constant 0 : i32
    %c0_i32_1 = arith.constant 0 : i32
    return %c0_i32, %c0_i32_0 : i32, i32
  }
  func.func @transform_6(%arg0: i32) -> (i32, i32) {
    %c0_i32 = arith.constant 0 : i32
    %c0_i32_0 = arith.constant 0 : i32
    %c0_i32_1 = arith.constant 0 : i32
    return %c0_i32, %c0_i32_0 : i32, i32
  }
  func.func @transform_7(%arg0: i32) -> (i32, i32) {
    %c0_i32 = arith.constant 0 : i32
    %c0_i32_0 = arith.constant 0 : i32
    return %c0_i32, %arg0 : i32, i32
  }
}

</mosaic_0001>

<llo_original>
// kernel: tpu_custom_call.1
$region0: #{tpu_custom_call.1}
  #allocation0 [shape = 'u32[]', space=smem, size = 0x4, offset = 0x4, fixed_abs, tag = 'smem constant byte address 0x4 - core index']
  #allocation1 [shape = 'u32[144,128]{1,0:T(1,128)}', space=vmem, size = 0x12000, scoped, tag = 'internal scratch']
  %s0 = inlined_call_operand.vmem [shape: f32[6], index: 0, kind: input, shape index: {}]
  %s1 = inlined_call_operand.vmem [shape: f32[8,32], index: 1, kind: input, shape index: {}]
  %s2 = inlined_call_operand.vmem [shape: f32[4,8], index: 2, kind: input, shape index: {}]
  %s3 = inlined_call_operand.vmem [shape: f32[32,32], index: 3, kind: input, shape index: {}]
  %s4 = inlined_call_operand.vmem [shape: f32[32,1], index: 4, kind: input, shape index: {}]
  %s5 = inlined_call_operand.vmem [shape: f32[3,32], index: 5, kind: input, shape index: {}]
  %s6 = inlined_call_operand.vmem [shape: f32[3,1], index: 6, kind: input, shape index: {}]
  %s7 = inlined_call_operand.hbm [shape: f32[4,8], index: 7, kind: output, shape index: {}]
  %s8 = sld [smem:[#allocation0]]
  $region42: #{tpu_custom_call.1} parent=0
    _
  %s10 = ssub.s32 1, %s8
  %s11 = scalar_select 0, %s10, %s8
  $region1: #{tpu_custom_call.1} parent=0
    #allocation2 [shape = 'u8[512]{0}', space=smem, size = 0x200, scoped, tag = 'input window, operand 0, single buffered']
    #allocation3 [shape = 's32[1]{0}', space=sflag, size = 0x4, scoped, tag = 'scoped memory for tpu_custom_call.1']
    #allocation4 [shape = 's32[1]{0}', space=sflag, size = 0x4, scoped, tag = 'scoped memory for tpu_custom_call.1']
    #allocation5 [shape = 'u8[2048]{0}', space=vmem, size = 0x800, scoped, tag = 'output window, operand 0, single buffered']
    %12 = vsyncpa [#allocation4], 0
    %13 = vsyncpa [#allocation3], 0
    // Predicated region
    $region2: #{tpu_custom_call.1} parent=1 // pred_check
      _
    $region3: #{tpu_custom_call.1} parent=1 // pred_check_branch
      %15 = sbr.rel (0) target = $region5
    $region4: #{tpu_custom_call.1} parent=1 // pred_region
      %s17 = ssub.s32 16, 16
      %18 = vsyncadd [#allocation4], %s17
      %s20 = sshll.u32 %s0, 4
      %s21 = int_to_ptr.vmem [resolvable:$true] %s20
      %23 = dma.vmem_to_smem %s21, 16, [#allocation2], [#allocation4]
    $region5: #{tpu_custom_call.1} parent=1 // pred_fallthru
      _
    // Predicated region
    $region6: #{tpu_custom_call.1} parent=1 // pred_check
      _
    $region7: #{tpu_custom_call.1} parent=1 // pred_check_branch
      %25 = sbr.rel (0) target = $region9
    $region8: #{tpu_custom_call.1} parent=1 // pred_region
      _
    $region9: #{tpu_custom_call.1} parent=1 // pred_fallthru
      _
    // Predicated region
    $region10: #{tpu_custom_call.1} parent=1 // pred_check
      _
    $region11: #{tpu_custom_call.1} parent=1 // pred_check_branch
      %27 = sbr.rel (0) target = $region13
    $region12: #{tpu_custom_call.1} parent=1 // pred_region
      _
    $region13: #{tpu_custom_call.1} parent=1 // pred_fallthru
      _
    // Predicated region
    $region14: #{tpu_custom_call.1} parent=1 // pred_check
      _
    $region15: #{tpu_custom_call.1} parent=1 // pred_check_branch
      %29 = sbr.rel (0) target = $region17
    $region16: #{tpu_custom_call.1} parent=1 // pred_region
      _
    $region17: #{tpu_custom_call.1} parent=1 // pred_fallthru
      _
    // Predicated region
    $region18: #{tpu_custom_call.1} parent=1 // pred_check
      _
    $region19: #{tpu_custom_call.1} parent=1 // pred_check_branch
      %31 = sbr.rel (0) target = $region21
    $region20: #{tpu_custom_call.1} parent=1 // pred_region
      _
    $region21: #{tpu_custom_call.1} parent=1 // pred_fallthru
      _
    // Predicated region
    $region22: #{tpu_custom_call.1} parent=1 // pred_check
      _
    $region23: #{tpu_custom_call.1} parent=1 // pred_check_branch
      %33 = sbr.rel (0) target = $region25
    $region24: #{tpu_custom_call.1} parent=1 // pred_region
      _
    $region25: #{tpu_custom_call.1} parent=1 // pred_fallthru
      _
    // Predicated region
    $region26: #{tpu_custom_call.1} parent=1 // pred_check
      _
    $region27: #{tpu_custom_call.1} parent=1 // pred_check_branch
      %35 = sbr.rel (0) target = $region29
    $region28: #{tpu_custom_call.1} parent=1 // pred_region
      _
    $region29: #{tpu_custom_call.1} parent=1 // pred_fallthru
      _
    // Predicated region
    $region30: #{tpu_custom_call.1} parent=1 // pred_check
      _
    $region31: #{tpu_custom_call.1} parent=1 // pred_check_branch
      %37 = sbr.rel (0) target = $region33
    $region32: #{tpu_custom_call.1} parent=1 // pred_region
      %38 = dma.done [#allocation4], 16
    $region33: #{tpu_custom_call.1} parent=1 // pred_fallthru
      _
    %39 = sfence
    %v40 = vld [vmem:[%s3] sm:$0xff]
    %v41 = vld [vmem:[%s3 + $0x8] sm:$0xff]
    %v42 = vld [vmem:[%s3 + $0x10] sm:$0xff]
    %v43 = vld [vmem:[%s3 + $0x18] sm:$0xff]
    %v44 = vld [vmem:[%s1] sm:$0xff]
    %v45 = vld [vmem:[%s4] sm:$0xff]
    %v46 = vld [vmem:[%s4 + $0x8] sm:$0xff]
    %v47 = vld [vmem:[%s4 + $0x10] sm:$0xff]
    %v48 = vld [vmem:[%s4 + $0x18] sm:$0xff]
    %50 = vset.pattern.permute.xlu0 0
    %51 = vperm.xlu0 %50, %v45
    %v52 = vpop.permute.xlu0 %51
    %55 = vset.pattern.permute.xlu0 0
    %56 = vperm.xlu0 %55, %v46
    %v57 = vpop.permute.xlu0 %56
    %60 = vset.pattern.permute.xlu0 0
    %61 = vperm.xlu0 %60, %v47
    %v62 = vpop.permute.xlu0 %61
    %65 = vset.pattern.permute.xlu0 0
    %66 = vperm.xlu0 %65, %v48
    %v67 = vpop.permute.xlu0 %66
    %vm69 = vcmask 261120
    %v71 = vsel %vm69, %v40, 0
    %v74 = vsel %vm69, %v41, 0
    %v77 = vsel %vm69, %v42, 0
    %v80 = vsel %vm69, %v43, 0
    %v83 = vsel %vm69, %v44, 0
    %85 = vmatprep.subr.mxu0 0.0
    %86 = vmatpush1.xpose.msra.mxu0 %v83
    %87 = vmatprep.subr.mxu0 0.0
    %88 = vmatpush1.xpose.msra.mxu0 0.0
    %89 = vmatprep.subr.mxu0 0.0
    %90 = vmatpush1.xpose.msra.mxu0 0.0
    %91 = vmatprep.subr.mxu0 0.0
    %92 = vmatpush1.xpose.msra.mxu0 0.0
    %93 = vmatprep.subr.mxu0 0.0
    %94 = vmatpush1.xpose.msra.mxu0 0.0
    %95 = vmatprep.subr.mxu0 0.0
    %96 = vmatpush1.xpose.msra.mxu0 0.0
    %97 = vmatprep.subr.mxu0 0.0
    %98 = vmatpush1.xpose.msra.mxu0 0.0
    %99 = vmatprep.subr.mxu0 0.0
    %100 = vmatpush1.xpose.msra.mxu0 0.0
    %101 = vmatprep.subr.mxu0 0.0
    %102 = vmatpush1.xpose.msra.mxu0 0.0
    %103 = vmatprep.subr.mxu0 0.0
    %104 = vmatpush1.xpose.msra.mxu0 0.0
    %105 = vmatprep.subr.mxu0 0.0
    %106 = vmatpush1.xpose.msra.mxu0 0.0
    %107 = vmatprep.subr.mxu0 0.0
    %108 = vmatpush1.xpose.msra.mxu0 0.0
    %109 = vmatprep.subr.mxu0 0.0
    %110 = vmatpush1.xpose.msra.mxu0 0.0
    %111 = vmatprep.subr.mxu0 0.0
    %112 = vmatpush1.xpose.msra.mxu0 0.0
    %113 = vmatprep.subr.mxu0 0.0
    %114 = vmatpush1.xpose.msra.mxu0 0.0
    %115 = vmatprep.subr.mxu0 0.0
    %116 = vmatpush1.xpose.msra.mxu0 0.0
    %117 = vmatprep.subr.mxu0 0.0
    %118 = vmatpush1.xpose.msra.mxu0 0.0
    %119 = vmatprep.subr.mxu0 0.0
    %120 = vmatpush1.xpose.msra.mxu0 0.0
    %121 = vmatprep.subr.mxu0 0.0
    %122 = vmatpush1.xpose.msra.mxu0 0.0
    %123 = vmatprep.subr.mxu0 0.0
    %124 = vmatpush1.xpose.msra.mxu0 0.0
    %125 = vmatprep.subr.mxu0 0.0
    %126 = vmatpush1.xpose.msra.mxu0 0.0
    %127 = vmatprep.subr.mxu0 0.0
    %128 = vmatpush1.xpose.msra.mxu0 0.0
    %129 = vmatprep.subr.mxu0 0.0
    %130 = vmatpush1.xpose.msra.mxu0 0.0
    %131 = vmatprep.subr.mxu0 0.0
    %132 = vmatpush1.xpose.msra.mxu0 0.0
    %133 = vmatprep.subr.mxu0 0.0
    %134 = vmatpush1.xpose.msra.mxu0 0.0
    %135 = vmatprep.subr.mxu0 0.0
    %136 = vmatpush1.xpose.msra.mxu0 0.0
    %137 = vmatprep.subr.mxu0 0.0
    %138 = vmatpush1.xpose.msra.mxu0 0.0
    %139 = vmatprep.subr.mxu0 0.0
    %140 = vmatpush1.xpose.msra.mxu0 0.0
    %141 = vmatprep.subr.mxu0 0.0
    %142 = vmatpush1.xpose.msra.mxu0 0.0
    %143 = vmatprep.subr.mxu0 0.0
    %144 = vmatpush1.xpose.msra.mxu0 0.0
    %145 = vmatprep.subr.mxu0 0.0
    %146 = vmatpush1.xpose.msra.mxu0 0.0
    %147 = vmatprep.subr.mxu0 0.0
    %148 = vmatpush1.xpose.msra.mxu0 0.0
    %149 = vmatprep.mubr.f32.mxu0 0.0
    %150 = vmatmul.mubr.f32.gmra.mrb[0].mxu0 %v71
    %v151 = vpop.f32.mrb[0].mxu0
    %v152 = vadd.f32 %v52, %v151
    %v153 = vpop.f32.mrb[0].mxu0
    %154 = vmatprep.mubr.f32.mxu0 0.0
    %155 = vmatmul.mubr.f32.gmra.mrb[0].mxu0 %v74
    %v156 = vpop.f32.mrb[0].mxu0
    %v157 = vadd.f32 %v57, %v156
    %v158 = vpop.f32.mrb[0].mxu0
    %159 = vmatprep.mubr.f32.mxu0 0.0
    %160 = vmatmul.mubr.f32.gmra.mrb[0].mxu0 %v77
    %v161 = vpop.f32.mrb[0].mxu0
    %v162 = vadd.f32 %v62, %v161
    %v163 = vpop.f32.mrb[0].mxu0
    %164 = vmatprep.mubr.f32.mxu0 0.0
    %165 = vmatmul.mubr.f32.gmra.mrb[0].mxu0 %v80
    %v166 = vpop.f32.mrb[0].mxu0
    %v167 = vadd.f32 %v67, %v166
    %v168 = vpop.f32.mrb[0].mxu0
    %169 = vdwg.mxu0
    %v170 = vld [vmem:[%s5] sm:$0x7]
    %v171 = vld [vmem:[%s6] sm:$0x7]
    %173 = vset.pattern.permute.xlu0 0
    %174 = vperm.xlu0 %173, %v171
    %v175 = vpop.permute.xlu0 %174
    %v178 = vsel %vm69, %v170, 0
    %180 = vmatprep.subr.mxu0 0.0
    %181 = vmatpush1.msra.mxu0 %v152
    %182 = vmatprep.subr.mxu0 0.0
    %183 = vmatpush1.msra.mxu0 %v157
    %184 = vmatprep.subr.mxu0 0.0
    %185 = vmatpush1.msra.mxu0 %v162
    %186 = vmatprep.subr.mxu0 0.0
    %187 = vmatpush1.msra.mxu0 %v167
    %188 = vmatprep.subr.mxu0 0.0
    %189 = vmatpush1.msra.mxu0 0.0
    %190 = vmatprep.subr.mxu0 0.0
    %191 = vmatpush1.msra.mxu0 0.0
    %192 = vmatprep.subr.mxu0 0.0
    %193 = vmatpush1.msra.mxu0 0.0
    %194 = vmatprep.subr.mxu0 0.0
    %195 = vmatpush1.msra.mxu0 0.0
    %196 = vmatprep.subr.mxu0 0.0
    %197 = vmatpush1.msra.mxu0 0.0
    %198 = vmatprep.subr.mxu0 0.0
    %199 = vmatpush1.msra.mxu0 0.0
    %200 = vmatprep.subr.mxu0 0.0
    %201 = vmatpush1.msra.mxu0 0.0
    %202 = vmatprep.subr.mxu0 0.0
    %203 = vmatpush1.msra.mxu0 0.0
    %204 = vmatprep.subr.mxu0 0.0
    %205 = vmatpush1.msra.mxu0 0.0
    %206 = vmatprep.subr.mxu0 0.0
    %207 = vmatpush1.msra.mxu0 0.0
    %208 = vmatprep.subr.mxu0 0.0
    %209 = vmatpush1.msra.mxu0 0.0
    %210 = vmatprep.subr.mxu0 0.0
    %211 = vmatpush1.msra.mxu0 0.0
    %212 = vmatprep.subr.mxu0 0.0
    %213 = vmatpush1.msra.mxu0 0.0
    %214 = vmatprep.subr.mxu0 0.0
    %215 = vmatpush1.msra.mxu0 0.0
    %216 = vmatprep.subr.mxu0 0.0
    %217 = vmatpush1.msra.mxu0 0.0
    %218 = vmatprep.subr.mxu0 0.0
    %219 = vmatpush1.msra.mxu0 0.0
    %220 = vmatprep.subr.mxu0 0.0
    %221 = vmatpush1.msra.mxu0 0.0
    %222 = vmatprep.subr.mxu0 0.0
    %223 = vmatpush1.msra.mxu0 0.0
    %224 = vmatprep.subr.mxu0 0.0
    %225 = vmatpush1.msra.mxu0 0.0
    %226 = vmatprep.subr.mxu0 0.0
    %227 = vmatpush1.msra.mxu0 0.0
    %228 = vmatprep.subr.mxu0 0.0
    %229 = vmatpush1.msra.mxu0 0.0
    %230 = vmatprep.subr.mxu0 0.0
    %231 = vmatpush1.msra.mxu0 0.0
    %232 = vmatprep.subr.mxu0 0.0
    %233 = vmatpush1.msra.mxu0 0.0
    %234 = vmatprep.subr.mxu0 0.0
    %235 = vmatpush1.msra.mxu0 0.0
    %236 = vmatprep.subr.mxu0 0.0
    %237 = vmatpush1.msra.mxu0 0.0
    %238 = vmatprep.subr.mxu0 0.0
    %239 = vmatpush1.msra.mxu0 0.0
    %240 = vmatprep.subr.mxu0 0.0
    %241 = vmatpush1.msra.mxu0 0.0
    %242 = vmatprep.subr.mxu0 0.0
    %243 = vmatpush1.msra.mxu0 0.0
    %244 = vmatprep.mubr.f32.mxu0 0.0
    %245 = vmatmul.mubr.f32.gmra.mrb[0].mxu0 %v178
    %v246 = vpop.f32.mrb[0].mxu0
    %v247 = vadd.f32 %v175, %v246
    %v248 = vpop.f32.mrb[0].mxu0
    %249 = vdwg.mxu0
    %v250 = vtanh.pop %v247
    %s251 = sld [smem:[#allocation2]]
    %s252 = sld [smem:[#allocation2 + $0x1]]
    %s253 = sld [smem:[#allocation2 + $0x2]]
    %s254 = sld [smem:[#allocation2 + $0x3]]
    %s255 = sld [smem:[#allocation2 + $0x4]]
    %s256 = sld [smem:[#allocation2 + $0x5]]
    %v257 = vstv %s251
    %v258 = vmul.f32 %v257, %v250
    %v259 = vstv %s252
    %v260 = vmul.f32 %v259, %v250
    %v262 = vrot.slane %v260, 1
    %v264 = vadd.f32 %v258, %v262
    %v265 = vstv %s253
    %v266 = vmul.f32 %v265, %v250
    %v268 = vrot.slane %v266, 2
    %v270 = vadd.f32 %v264, %v268
    %v271 = vstv %s254
    %v272 = vadd.f32 %v270, %v271
    %v273 = vtanh.pop %v272
    %v274 = vmul.f32 %v273, 4.0
    %v275 = vadd.f32 %v274, 24.0
    %v276 = vld [vmem:[%s2] sm:$0xf]
    %v277 = vstv %s255
    %v278 = vmul.f32 %v277, %v276
    %v279 = vstv %s256
    %v280 = vadd.f32 %v278, %v279
    %v281 = vtanh.pop %v280
    %v282 = vmul.f32 %v281, 2.0
    %v283 = vlaneseq
    %v284 = vshrl.u32 %v283, 7
    %v285 = vsub.s32 0, %v284
    %v286 = vrot.slane %v275, %v285
    %v287 = vadd.f32 %v286, %v282
    %vm288 = vcmask 60416
    %289 = vst.msk [vmem:[#allocation5] sm:$0xf] %vm288, %v287
    // Predicated region
    $region34: #{tpu_custom_call.1} parent=1 // pred_check
      _
    $region35: #{tpu_custom_call.1} parent=1 // pred_check_branch
      %291 = sbr.rel (0) target = $region37
    $region36: #{tpu_custom_call.1} parent=1 // pred_region
      %s293 = ssub.s32 64, 64
      %294 = vsyncadd [#allocation3], %s293
      %s296 = sshll.u32 [#allocation5], 4
      %s297 = int_to_ptr.vmem [resolvable:$true] %s296
      %299 = dma.vmem_to_hbm [thread:$0]  %s297, 64, %s7, [#allocation3]
    $region37: #{tpu_custom_call.1} parent=1 // pred_fallthru
      _
    // Predicated region
    $region38: #{tpu_custom_call.1} parent=1 // pred_check
      _
    $region39: #{tpu_custom_call.1} parent=1 // pred_check_branch
      %301 = sbr.rel (0) target = $region41
    $region40: #{tpu_custom_call.1} parent=1 // pred_region
      %302 = dma.done [#allocation3], 64
    $region41: #{tpu_custom_call.1} parent=1 // pred_fallthru
      _
    %303 = vsyncpa [#allocation3], 1
    %304 = vsyncpa [#allocation4], 1

</llo_original>
